<compile_context>
chip_gen: v7x
topology: tpu7x:2x2x1
jax: 0.10.0
libtpu: 0.0.40
codegen_flags: <defaults>
</compile_context>

<pallas_src>
import functools

import jax
import jax.numpy as jnp
from jax.experimental import pallas as pl
from jax.experimental.pallas import tpu as pltpu


def _gat_kernel(x_ref, w_ref, g_ref, b_ref, o_ref, h_ref, *,
                approx_recip, n_valid):
    # x_ref : (TB, Np, in_c)  node features for TB graphs of this batch tile
    # w_ref : (in_c, Cp)      projection weight (out_c zero-padded to Cp lanes)
    # g_ref : (TQ, Np)        adjacency rows for this query tile (graph dtype)
    # b_ref : (1, Cp)         bias (zero-padded), f32
    # o_ref : (TB, TQ, Cp)    output slab
    # h_ref : (TB, Np, Cp)    VMEM scratch: projected features (matmul dtype)
    q = pl.program_id(1)
    tb_sz, np_, cp = h_ref.shape
    tq = o_ref.shape[1]
    in_c = x_ref.shape[2]
    md = h_ref.dtype            # MXU operand dtype (bf16 fast / f32 precise)

    # Phase 1 (first query tile of each batch tile): project every node once.
    # All tb graphs are fused into a single (tb*Np, in_c) x (in_c, Cp) matmul
    # (better MXU cadence than tb tiny matmuls), result stashed for reuse by
    # every later query tile of this batch tile.
    @pl.when(q == 0)
    def _():
        x = x_ref[...].astype(md).reshape(tb_sz * np_, in_c)
        w = w_ref[...].astype(md)
        h = jnp.dot(x, w, preferred_element_type=jnp.float32)
        h_ref[...] = h.reshape(tb_sz, np_, cp).astype(md)

    row0 = pl.multiple_of(q * tq, tq)
    bias = b_ref[...]                                   # (1, Cp) f32

    padded = n_valid < np_
    if padded:
        # Pad key columns are masked harder (-1e30) than real masked edges
        # (-1e16) so a row with no real edges still softmaxes uniformly over
        # the *real* N keys, matching the torch behavior.
        key_is_pad = (jax.lax.broadcasted_iota(jnp.int32, (tq, np_), 1)
                      >= n_valid)

    def body(i, carry):
        h_blk = h_ref.at[i]                             # (Np, Cp) view
        h_all = h_blk[...]
        h_q = h_blk[pl.ds(row0, tq), :]                 # (TQ, Cp)

        # scores = (h_q . h_all^T) * graph -- contract the feature dim of both
        # operands directly (standard flash-attention NT contraction; no
        # explicit h^T is materialized).
        scores = jax.lax.dot_general(
            h_q, h_all, (((1,), (1,)), ((), ())),
            preferred_element_type=jnp.float32)
        scores = scores * g_ref[...].astype(jnp.float32)    # (TQ, Np) f32

        # masked_fill_(scores == 0, -1e16): faithful to the PyTorch module --
        # exact zeros (graph == 0 entries, or an h.h^T that is exactly 0) are
        # masked; rows with no edges softmax to uniform, as in the original.
        scores = jnp.where(scores == 0.0, jnp.float32(-1e16), scores)
        if padded:
            scores = jnp.where(key_is_pad, jnp.float32(-1e30), scores)

        # Row softmax in f32 (full key row per grid step -> no online softmax).
        m = jnp.max(scores, axis=-1, keepdims=True)
        e = jnp.exp(scores - m)
        denom = jnp.sum(e, axis=-1, keepdims=True)
        attn = e * pl.reciprocal(denom, approx=approx_recip)

        out = jnp.dot(attn.astype(md), h_all,
                      preferred_element_type=jnp.float32)
        o_ref[i] = (out + bias).astype(o_ref.dtype)
        return carry

    jax.lax.fori_loop(0, tb_sz, body, 0)


def _ceil_to(x, m):
    return ((x + m - 1) // m) * m


def _vmem_budget_bytes():
    # ~3/4 of physical VMEM: ~48 MiB on v7x (64 MiB phys), ~96 MiB on
    # v5e/v6e (128 MiB phys).  Fallback is the smallest (v7x) capacity.
    try:
        cap = pltpu.get_tpu_info().vmem_capacity_bytes
    except Exception:
        cap = 64 * 1024 * 1024
    return min(int(cap * 3 // 4), 100 * 1024 * 1024)


def _block_bytes(tb, tq, np_, in_c, cp, md_bytes, g_bytes):
    x_b = tb * np_ * in_c * 4 * 2          # node features, double-buffered
    g_b = tq * np_ * g_bytes * 2           # adjacency slab, double-buffered
    o_b = tb * tq * cp * 4 * 2             # output slab, double-buffered
    h_b = tb * np_ * cp * md_bytes         # projected-feature scratch
    w_b = in_c * cp * 4                    # weight, single-buffered
    b_b = cp * 4                           # bias
    temps = 4 * tq * np_ * 4               # scores/e/attn f32 temporaries
    return x_b + g_b + o_b + h_b + w_b + b_b + temps


def _plan_tiles(B, N, in_c, out_c, md_bytes, g_bytes):
    cp = _ceil_to(out_c, 128)
    # Pad N only when a full-row query tile would be needed but N is ragged.
    np_ = _ceil_to(N, 128) if (N > 512 and N % 128 != 0) else N

    budget = _vmem_budget_bytes()
    tile_budget = budget - 6 * 1024 * 1024        # headroom for Mosaic scratch

    if np_ <= 512:
        tq = np_
    else:
        tq = next((c for c in (512, 256, 128)
                   if np_ % c == 0
                   and _block_bytes(1, c, np_, in_c, cp, md_bytes, g_bytes)
                   <= tile_budget), 128)
    # TODO(synk): if even (tb=1, tq=128) overflows the budget (extreme N) a
    # key-axis tiling with online softmax would be needed.

    # Batch tile: amortize the adjacency HBM re-stream.  Keep B // tb >= 2 so
    # the "parallel" batch axis still shards across v7x's two TensorCores, and
    # require np_ % 8 == 0 when tb > 1 so the fused projection reshape stays
    # layout-trivial.
    tb_cap = max(1, B // 2)
    if np_ % 8 != 0:
        tb_cap = 1
    tb_cap = min(tb_cap, 128)
    tb = 1
    for cand in range(tb_cap, 0, -1):
        if B % cand == 0 and _block_bytes(
                cand, tq, np_, in_c, cp, md_bytes, g_bytes) <= tile_budget:
            tb = cand
            break

    needed = _block_bytes(tb, tq, np_, in_c, cp, md_bytes, g_bytes)
    vmem_limit = max(32 * 1024 * 1024,
                     min(budget, needed + 8 * 1024 * 1024))
    return tb, tq, np_, cp, vmem_limit


def graph_attention_layer(inputs, graph, weight, bias, *,
                          matmul_dtype=jnp.bfloat16,
                          graph_dtype=jnp.bfloat16,
                          approx_recip=True):
    """inputs: [B, N, in_c], graph: [N, N], weight: [in_c, out_c], bias: [out_c].

    graph_dtype=bf16 is exact for 0/1 adjacencies (default); pass jnp.float32
    for arbitrary real edge weights.
    """
    B, N, in_c = inputs.shape
    out_c = weight.shape[1]
    md_bytes = jnp.dtype(matmul_dtype).itemsize
    g_bytes = jnp.dtype(graph_dtype).itemsize

    tb, tq, np_, cp, vmem_limit = _plan_tiles(B, N, in_c, out_c,
                                              md_bytes, g_bytes)

    # Padding: zero node-feature / adjacency pad rows, lane-pad out_c -> cp.
    if np_ != N:
        inputs = jnp.pad(inputs, ((0, 0), (0, np_ - N), (0, 0)))
        graph = jnp.pad(graph, ((0, np_ - N), (0, np_ - N)))
    if cp != out_c:
        weight = jnp.pad(weight, ((0, 0), (0, cp - out_c)))
        bias = jnp.pad(bias, (0, cp - out_c))
    graph = graph.astype(graph_dtype)      # halves the dominant HBM stream
    bias2d = bias.reshape(1, cp).astype(jnp.float32)

    grid = (B // tb, np_ // tq)
    kernel = functools.partial(_gat_kernel,
                               approx_recip=approx_recip, n_valid=N)

    flops = 2 * B * np_ * in_c * cp + 4 * B * np_ * np_ * cp
    bytes_accessed = (4 * B * np_ * in_c + 4 * in_c * cp
                      + (B // tb) * np_ * np_ * g_bytes
                      + 4 * cp + 4 * B * np_ * cp)

    out = pl.pallas_call(
        kernel,
        out_shape=jax.ShapeDtypeStruct((B, np_, cp), jnp.float32),
        grid_spec=pltpu.PrefetchScalarGridSpec(
            num_scalar_prefetch=0,
            grid=grid,
            in_specs=[
                # Node features: constant across the inner q axis -> fetched
                # once per batch tile by the pipeline.
                pl.BlockSpec((tb, np_, in_c), lambda b, q: (b, 0, 0)),
                # Grid-invariant parameters: single-buffered.
                pl.BlockSpec((in_c, cp), lambda b, q: (0, 0),
                             pipeline_mode=pl.Buffered(1)),
                # Adjacency rows for the current query tile (graph dtype).
                pl.BlockSpec((tq, np_), lambda b, q: (q, 0)),
                pl.BlockSpec((1, cp), lambda b, q: (0, 0),
                             pipeline_mode=pl.Buffered(1)),
            ],
            out_specs=pl.BlockSpec((tb, tq, cp), lambda b, q: (b, q, 0)),
            scratch_shapes=[pltpu.VMEM((tb, np_, cp), matmul_dtype)],
        ),
        compiler_params=pltpu.CompilerParams(
            dimension_semantics=("parallel", "arbitrary"),
            vmem_limit_bytes=vmem_limit,
        ),
        cost_estimate=pl.CostEstimate(
            flops=flops,
            transcendentals=B * np_ * np_,
            bytes_accessed=bytes_accessed,
        ),
    )(inputs, weight, graph, bias2d)

    # Slice off lane / node padding (extra pass only when padding was needed).
    if np_ != N or cp != out_c:
        out = out[:, :N, :out_c]
    return out


def graph_attention_layer_ref(inputs, graph, weight, bias,
                              matmul_dtype=jnp.float32):
    """Pure-JAX reference.  matmul_dtype=f32 matches the PyTorch forward
    exactly; matmul_dtype=bf16 mirrors the kernel fast path's operand rounding
    (f32 accumulation, f32 mask/softmax)."""
    md = matmul_dtype
    h = jnp.einsum("bni,io->bno", inputs.astype(md), weight.astype(md),
                   preferred_element_type=jnp.float32)
    hm = h.astype(md)
    scores = jnp.einsum("bno,bmo->bnm", hm, hm,
                        preferred_element_type=jnp.float32) * graph[None]
    scores = jnp.where(scores == 0.0, -1e16, scores)
    attn = jax.nn.softmax(scores, axis=2)
    out = jnp.einsum("bnm,bmo->bno", attn.astype(md), hm,
                     preferred_element_type=jnp.float32)
    return out + bias


if __name__ == "__main__":
    # Small deterministic example: B=2 graphs, N=8 nodes, in_c=4, out_c=32.
    B, N, in_c, out_c = 2, 8, 4, 32

    key = jax.random.PRNGKey(0)
    k_x, k_w, k_b, k_g = jax.random.split(key, 4)

    inputs = jax.random.normal(k_x, (B, N, in_c), dtype=jnp.float32)
    # Parameters: nn.init.normal_ on W (torch [out_c, in_c] -> stored [in_c, out_c]) and b.
    weight = jax.random.normal(k_w, (in_c, out_c), dtype=jnp.float32)
    bias = jax.random.normal(k_b, (out_c,), dtype=jnp.float32)
    # Adjacency with some zeros so the masked_fill path is exercised.
    graph = (jax.random.uniform(k_g, (N, N)) > 0.4).astype(jnp.float32)

    # Precise path (f32 MXU operands, f32 graph, exact reciprocal): must match
    # the pure f32 reference tightly.
    out_precise = graph_attention_layer(
        inputs, graph, weight, bias,
        matmul_dtype=jnp.float32, graph_dtype=jnp.float32,
        approx_recip=False)
    out_precise = jax.block_until_ready(out_precise)
    ref_f32 = graph_attention_layer_ref(inputs, graph, weight, bias)
    assert out_precise.shape == (B, N, out_c)
    assert jnp.allclose(out_precise, ref_f32, atol=1e-4, rtol=1e-4), \
        "precise path mismatch vs reference"

    # Fast path (bf16 MXU operands + bf16 graph stream, f32 accumulation,
    # approx reciprocal): compare against a reference with the same rounding.
    out_fast = graph_attention_layer(inputs, graph, weight, bias)
    out_fast = jax.block_until_ready(out_fast)
    ref_bf16 = graph_attention_layer_ref(inputs, graph, weight, bias,
                                         matmul_dtype=jnp.bfloat16)
    assert out_fast.shape == (B, N, out_c)
    assert jnp.allclose(out_fast, ref_bf16, atol=5e-2, rtol=5e-2), \
        "fast path mismatch vs bf16 reference"

    print("KERNEL_OK")
</pallas_src>

<mosaic_0001>
module attributes {stable_mosaic.version = 11 : i64} {
  func.func @_gat_kernel(%arg0: i32, %arg1: i32, %arg2: memref<1x8x4xf32, #tpu.memory_space<vmem>>, %arg3: memref<4x128xf32, #tpu.memory_space<vmem>>, %arg4: memref<8x8xf32, #tpu.memory_space<vmem>>, %arg5: memref<1x128xf32, #tpu.memory_space<vmem>>, %arg6: memref<1x8x128xf32, #tpu.memory_space<vmem>>, %arg7: memref<1x8x128xf32, #tpu.memory_space<vmem>>) attributes {dimension_semantics = [#tpu.dimension_semantics<parallel>, #tpu.dimension_semantics<arbitrary>], iteration_bounds = array<i64: 2, 1>, scalar_prefetch = 0 : i64, scratch_operands = 1 : i64, tpu.core_type = #tpu.core_type<tc>, window_params = [{transform_indices = @transform_0, window_bounds = array<i64: 1, 8, 4>}, {pipeline_mode = #tpu.pipeline_mode<synchronous>, transform_indices = @transform_1, window_bounds = array<i64: 4, 128>}, {transform_indices = @transform_2, window_bounds = array<i64: 8, 8>}, {pipeline_mode = #tpu.pipeline_mode<synchronous>, transform_indices = @transform_3, window_bounds = array<i64: 1, 128>}, {transform_indices = @transform_4, window_bounds = array<i64: 1, 8, 128>}]} {
    %c0_i32 = arith.constant 0 : i32
    %0 = arith.cmpi eq, %arg1, %c0_i32 : i32
    %1 = arith.extui %0 : i1 to i32
    %c0_i32_0 = arith.constant 0 : i32
    %2 = arith.cmpi ne, %1, %c0_i32_0 : i32
    scf.if %2 {
      %c0_17 = arith.constant 0 : index
      %c0_18 = arith.constant 0 : index
      %c0_19 = arith.constant 0 : index
      %37 = vector.load %arg2[%c0_17, %c0_18, %c0_19] : memref<1x8x4xf32, #tpu.memory_space<vmem>>, vector<1x8x4xf32>
      %38 = vector.shape_cast %37 : vector<1x8x4xf32> to vector<8x4xf32>
      %c0_20 = arith.constant 0 : index
      %c0_21 = arith.constant 0 : index
      %39 = vector.load %arg3[%c0_20, %c0_21] : memref<4x128xf32, #tpu.memory_space<vmem>>, vector<4x128xf32>
      %cst_22 = arith.constant dense<0.000000e+00> : vector<8x128xf32>
      %40 = tpu.matmul %38, %39, %cst_22 {dimension_numbers = #tpu.dot_dimension_numbers<[1], [0], [0], [1], [0, 0, 1, 1], [], []>} : vector<8x4xf32>, vector<4x128xf32>, vector<8x128xf32> -> vector<8x128xf32>
      %41 = vector.shape_cast %40 : vector<8x128xf32> to vector<1x8x128xf32>
      %c0_23 = arith.constant 0 : index
      %c0_24 = arith.constant 0 : index
      %c0_25 = arith.constant 0 : index
      %42 = vector.load %arg7[%c0_23, %c0_24, %c0_25] : memref<1x8x128xf32, #tpu.memory_space<vmem>>, vector<1x8x128xf32>
      tpu.vector_store %arg7[%c0_23, %c0_24, %c0_25], %41 {strides = array<i32>} : memref<1x8x128xf32, #tpu.memory_space<vmem>>, vector<1x8x128xf32>,
    } else {
    }
    %c8_i32 = arith.constant 8 : i32
    %3 = arith.muli %arg1, %c8_i32 : i32
    %4 = tpu.assume_multiple %3, 8 : i32
    %c0 = arith.constant 0 : index
    %c0_1 = arith.constant 0 : index
    %5 = vector.load %arg5[%c0, %c0_1] : memref<1x128xf32, #tpu.memory_space<vmem>>, vector<1x128xf32>
    %c0_i32_2 = arith.constant 0 : i32
    %6 = arith.index_cast %c0_i32_2 : i32 to index
    %c0_3 = arith.constant 0 : index
    %c0_4 = arith.constant 0 : index
    %7 = vector.load %arg7[%6, %c0_3, %c0_4] : memref<1x8x128xf32, #tpu.memory_space<vmem>>, vector<1x8x128xf32>
    %8 = vector.shape_cast %7 : vector<1x8x128xf32> to vector<8x128xf32>
    %c0_i32_5 = arith.constant 0 : i32
    %c0_i32_6 = arith.constant 0 : i32
    %9 = tpu.memref_slice %arg7[%c0_i32_2, %c0_i32_5, %c0_i32_6] : memref<1x8x128xf32, #tpu.memory_space<vmem>> -> memref<1x8x128xf32, #tpu.memory_space<vmem>>
    %10 = tpu.memref_squeeze %9 : memref<1x8x128xf32, #tpu.memory_space<vmem>> -> memref<8x128xf32, #tpu.memory_space<vmem>>
    %11 = arith.index_cast %4 : i32 to index
    %c0_7 = arith.constant 0 : index
    %12 = vector.load %10[%11, %c0_7] : memref<8x128xf32, #tpu.memory_space<vmem>>, vector<8x128xf32>
    %cst = arith.constant dense<0.000000e+00> : vector<8x8xf32>
    %13 = tpu.matmul %12, %8, %cst {dimension_numbers = #tpu.dot_dimension_numbers<[1], [1], [0], [0], [0, 0, 1, 0], [], []>} : vector<8x128xf32>, vector<8x128xf32>, vector<8x8xf32> -> vector<8x8xf32>
    %c0_8 = arith.constant 0 : index
    %c0_9 = arith.constant 0 : index
    %14 = vector.load %arg4[%c0_8, %c0_9] : memref<8x8xf32, #tpu.memory_space<vmem>>, vector<8x8xf32>
    %15 = arith.mulf %13, %14 : vector<8x8xf32>
    %cst_10 = arith.constant 0.000000e+00 : f32
    %16 = vector.broadcast %cst_10 : f32 to vector<8x8xf32>
    %17 = arith.cmpf oeq, %15, %16 : vector<8x8xf32>
    %cst_11 = arith.constant -1.000000e+16 : f32
    %18 = vector.broadcast %cst_11 : f32 to vector<8x8xf32>
    %19 = arith.select %17, %18, %15 : vector<8x8xi1>, vector<8x8xf32>
    %cst_12 = arith.constant dense<0xFF800000> : vector<8xf32>
    %20 = vector.multi_reduction <maximumf>, %19, %cst_12 [1] : vector<8x8xf32> to vector<8xf32>
    %21 = vector.shape_cast %20 : vector<8xf32> to vector<8x1xf32>
    %22 = vector.broadcast %21 : vector<8x1xf32> to vector<8x8xf32>
    %23 = arith.subf %19, %22 : vector<8x8xf32>
    %24 = math.exp %23 : vector<8x8xf32>
    %cst_13 = arith.constant dense<0.000000e+00> : vector<8xf32>
    %25 = vector.multi_reduction <add>, %24, %cst_13 [1] : vector<8x8xf32> to vector<8xf32>
    %26 = vector.shape_cast %25 : vector<8xf32> to vector<8x1xf32>
    %27 = tpu.reciprocal %26 : vector<8x1xf32> -> vector<8x1xf32>
    %28 = vector.broadcast %27 : vector<8x1xf32> to vector<8x8xf32>
    %29 = arith.mulf %24, %28 : vector<8x8xf32>
    %cst_14 = arith.constant dense<0.000000e+00> : vector<8x128xf32>
    %30 = tpu.matmul %29, %8, %cst_14 {dimension_numbers = #tpu.dot_dimension_numbers<[1], [0], [0], [1], [0, 0, 1, 1], [], []>} : vector<8x8xf32>, vector<8x128xf32>, vector<8x128xf32> -> vector<8x128xf32>
    %31 = vector.broadcast %5 : vector<1x128xf32> to vector<8x128xf32>
    %32 = arith.addf %30, %31 : vector<8x128xf32>
    %33 = arith.index_cast %c0_i32_2 : i32 to index
    %c0_15 = arith.constant 0 : index
    %c0_16 = arith.constant 0 : index
    %34 = vector.load %arg6[%33, %c0_15, %c0_16] : memref<1x8x128xf32, #tpu.memory_space<vmem>>, vector<1x8x128xf32>
    %35 = vector.shape_cast %34 : vector<1x8x128xf32> to vector<8x128xf32>
    %36 = vector.shape_cast %32 : vector<8x128xf32> to vector<1x8x128xf32>
    tpu.vector_store %arg6[%33, %c0_15, %c0_16], %36 {strides = array<i32>} : memref<1x8x128xf32, #tpu.memory_space<vmem>>, vector<1x8x128xf32>,
    %c1_i32 = arith.constant 1 : i32
    return
  }
  func.func @transform_0(%arg0: i32, %arg1: i32) -> (i32, i32, i32) {
    %c0_i32 = arith.constant 0 : i32
    %c0_i32_0 = arith.constant 0 : i32
    %c0_i32_1 = arith.constant 0 : i32
    return %arg0, %c0_i32, %c0_i32_0 : i32, i32, i32
  }
  func.func @transform_1(%arg0: i32, %arg1: i32) -> (i32, i32) {
    %c0_i32 = arith.constant 0 : i32
    %c0_i32_0 = arith.constant 0 : i32
    %c0_i32_1 = arith.constant 0 : i32
    return %c0_i32, %c0_i32_0 : i32, i32
  }
  func.func @transform_2(%arg0: i32, %arg1: i32) -> (i32, i32) {
    %c0_i32 = arith.constant 0 : i32
    %c0_i32_0 = arith.constant 0 : i32
    return %arg1, %c0_i32 : i32, i32
  }
  func.func @transform_3(%arg0: i32, %arg1: i32) -> (i32, i32) {
    %c0_i32 = arith.constant 0 : i32
    %c0_i32_0 = arith.constant 0 : i32
    %c0_i32_1 = arith.constant 0 : i32
    return %c0_i32, %c0_i32_0 : i32, i32
  }
  func.func @transform_4(%arg0: i32, %arg1: i32) -> (i32, i32, i32) {
    %c0_i32 = arith.constant 0 : i32
    %c0_i32_0 = arith.constant 0 : i32
    return %arg0, %arg1, %c0_i32 : i32, i32, i32
  }
}

</mosaic_0001>

<llo_original>
// kernel: tpu_custom_call.1
$region0: #{tpu_custom_call.1}
  #allocation0 [shape = 'u32[]', space=smem, size = 0x4, offset = 0x4, fixed_abs, tag = 'smem constant byte address 0x4 - core index']
  #allocation1 [shape = 'u32[144,128]{1,0:T(1,128)}', space=vmem, size = 0x12000, scoped, tag = 'internal scratch']
  #allocation2 [shape = 'f32[1,8,128]{2,1,0:T(8,128)}', space=vmem, size = 0x1000, scoped, tag = 'scratch operand']
  %s0 = inlined_call_operand.vmem [shape: f32[2,8,4], index: 0, kind: input, shape index: {}]
  %s1 = inlined_call_operand.vmem [shape: f32[4,128], index: 1, kind: input, shape index: {}]
  %s2 = inlined_call_operand.vmem [shape: f32[8,8], index: 2, kind: input, shape index: {}]
  %s3 = inlined_call_operand.vmem [shape: f32[1,128], index: 3, kind: input, shape index: {}]
  %s4 = inlined_call_operand.hbm [shape: f32[2,8,128], index: 4, kind: output, shape index: {}]
  %s5 = sld [smem:[#allocation0]]
  $region53: #{tpu_custom_call.1} parent=0
    _
  %s7 = ssub.s32 1, %s5
  %s8 = scalar_select 0, %s7, %s5
  $region1: #{tpu_custom_call.1} parent=0
    #allocation3 [shape = 'u8[8192]{0}', space=vmem, size = 0x2000, scoped, tag = 'output window, operand 0']
    #allocation4 [shape = 's32[2]{0}', space=sflag, size = 0x8, scoped, tag = 'scoped memory for tpu_custom_call.1']
    %9 = vsyncpa [#allocation4], 0
    %s10 = scalar_lea.sflag [#allocation4], 1
    %11 = vsyncpa %s10, 0
    loop: start=0, step=1, limit=4
    $region2: #{tpu_custom_call.1} parent=1 // loop_pre_header
      _
    $region3: #{tpu_custom_call.1} parent=1 // loop_header
      %s13 = sphi 0, %s17
      %p14 = scmp.ge.s32.totalorder %s13, 4
      %s20 = sphi 0, %s32
      %s21 = sphi 0, %s28
      %s22 = sphi 0, %s20
      %s23 = sphi 0, %s21
      %s24 = sphi 0, %s22
      %s25 = sphi 0, %s23
      %s35 = sphi 0, %s37
      %s38 = sphi 0, %s35
      %s39 = sphi 0, %s38
      %s55 = sphi 0, %s39
      %s59 = sphi 0, %s59
      %s61 = sphi 0, %s59
      %s62 = sphi 0, %s61
      %s76 = sphi 0, %s62
      %s82 = sphi 0, %s84
      %s85 = sphi 0, %s82
      %s86 = sphi 0, %s85
      %s102 = sphi 0, %s86
      %s106 = sphi 0, %s106
      %s108 = sphi 0, %s106
      %s109 = sphi 0, %s108
      %s123 = sphi 0, %s109
      %s131 = sphi 0, %s133
      %s134 = sphi 0, %s131
      %s135 = sphi 0, %s134
      %s151 = sphi 0, %s135
    $region4: #{tpu_custom_call.1} parent=1 // loop_header_branch
      %16 = sbr.rel (%p14) target = $region8
    $region5: #{tpu_custom_call.1} parent=1 // loop_body
      %s18 = ssub.s32 %s13, 1
      %s19 = ssub.s32 %s13, 2
      %s26 = sadd.s32 1, %s21
      %p27 = scmp.ge.s32.totalorder %s26, 1
      %s28 = scalar_select %p27, 0, %s26
      %s29 = sadd.s32 1, %s20
      %s30 = scalar_select %p27, %s29, %s20
      %p31 = scmp.ge.s32.totalorder %s30, 2
      %s32 = scalar_select %p31, 0, %s30
      %s33 = ssub.s32 %s20, %s32
      %p34 = scmp.eq.s32.totalorder %s33, 0
      %s36 = sadd.s32 %s35, 1
      %s37 = scalar_select %p34, %s35, %s36
      %p40 = pneg %p34
      %p41 = scmp.eq.s32.totalorder %s13, 1
      %p42 = por %p40, %p41
      %p43 = scmp.ne.s32.totalorder %s35, %s38
      %p44 = scmp.eq.s32.totalorder %s13, 0
      %p45 = por %p43, %p44
      %p46 = scmp.ne.s32.totalorder %s35, %s38
      %p47 = scmp.eq.s32.totalorder %s18, 1
      %p48 = por %p46, %p47
      %p49 = scmp.ne.s32.totalorder %s38, %s39
      %p50 = scmp.eq.s32.totalorder %s18, 0
      %p51 = por %p49, %p50
      %p52 = scmp.ne.s32.totalorder %s38, %s39
      %p53 = scmp.eq.s32.totalorder %s19, 1
      %p54 = por %p52, %p53
      %p56 = scmp.ne.s32.totalorder %s39, %s55
      %p57 = scmp.eq.s32.totalorder %s19, 0
      %p58 = por %p56, %p57
      %s60 = sadd.s32 %s59, 1
      %p63 = scmp.eq.s32.totalorder %s13, 1
      %p64 = scmp.ne.s32.totalorder %s59, %s61
      %p65 = scmp.eq.s32.totalorder %s13, 0
      %p66 = por %p64, %p65
      %p67 = scmp.ne.s32.totalorder %s59, %s61
      %p68 = scmp.eq.s32.totalorder %s18, 1
      %p69 = por %p67, %p68
      %p70 = scmp.ne.s32.totalorder %s61, %s62
      %p71 = scmp.eq.s32.totalorder %s18, 0
      %p72 = por %p70, %p71
      %p73 = scmp.ne.s32.totalorder %s61, %s62
      %p74 = scmp.eq.s32.totalorder %s19, 1
      %p75 = por %p73, %p74
      %p77 = scmp.ne.s32.totalorder %s62, %s76
      %p78 = scmp.eq.s32.totalorder %s19, 0
      %p79 = por %p77, %p78
      %s80 = ssub.s32 %s21, %s28
      %p81 = scmp.eq.s32.totalorder %s80, 0
      %s83 = sadd.s32 %s82, 1
      %s84 = scalar_select %p81, %s82, %s83
      %p87 = pneg %p81
      %p88 = scmp.eq.s32.totalorder %s13, 1
      %p89 = por %p87, %p88
      %p90 = scmp.ne.s32.totalorder %s82, %s85
      %p91 = scmp.eq.s32.totalorder %s13, 0
      %p92 = por %p90, %p91
      %p93 = scmp.ne.s32.totalorder %s82, %s85
      %p94 = scmp.eq.s32.totalorder %s18, 1
      %p95 = por %p93, %p94
      %p96 = scmp.ne.s32.totalorder %s85, %s86
      %p97 = scmp.eq.s32.totalorder %s18, 0
      %p98 = por %p96, %p97
      %p99 = scmp.ne.s32.totalorder %s85, %s86
      %p100 = scmp.eq.s32.totalorder %s19, 1
      %p101 = por %p99, %p100
      %p103 = scmp.ne.s32.totalorder %s86, %s102
      %p104 = scmp.eq.s32.totalorder %s19, 0
      %p105 = por %p103, %p104
      %s107 = sadd.s32 %s106, 1
      %p110 = scmp.eq.s32.totalorder %s13, 1
      %p111 = scmp.ne.s32.totalorder %s106, %s108
      %p112 = scmp.eq.s32.totalorder %s13, 0
      %p113 = por %p111, %p112
      %p114 = scmp.ne.s32.totalorder %s106, %s108
      %p115 = scmp.eq.s32.totalorder %s18, 1
      %p116 = por %p114, %p115
      %p117 = scmp.ne.s32.totalorder %s108, %s109
      %p118 = scmp.eq.s32.totalorder %s18, 0
      %p119 = por %p117, %p118
      %p120 = scmp.ne.s32.totalorder %s108, %s109
      %p121 = scmp.eq.s32.totalorder %s19, 1
      %p122 = por %p120, %p121
      %p124 = scmp.ne.s32.totalorder %s109, %s123
      %p125 = scmp.eq.s32.totalorder %s19, 0
      %p126 = por %p124, %p125
      %s127 = ssub.s32 %s20, %s32
      %s128 = ssub.s32 %s21, %s28
      %s129 = sor.u32 %s127, %s128
      %p130 = scmp.eq.s32.totalorder %s129, 0
      %s132 = sadd.s32 %s131, 1
      %s133 = scalar_select %p130, %s131, %s132
      %p136 = pneg %p130
      %p137 = scmp.eq.s32.totalorder %s13, 1
      %p138 = por %p136, %p137
      %p139 = scmp.ne.s32.totalorder %s131, %s134
      %p140 = scmp.eq.s32.totalorder %s13, 0
      %p141 = por %p139, %p140
      %p142 = scmp.ne.s32.totalorder %s131, %s134
      %p143 = scmp.eq.s32.totalorder %s18, 1
      %p144 = por %p142, %p143
      %p145 = scmp.ne.s32.totalorder %s134, %s135
      %p146 = scmp.eq.s32.totalorder %s18, 0
      %p147 = por %p145, %p146
      %p148 = scmp.ne.s32.totalorder %s134, %s135
      %p149 = scmp.eq.s32.totalorder %s19, 1
      %p150 = por %p148, %p149
      %p152 = scmp.ne.s32.totalorder %s135, %s151
      %p153 = scmp.eq.s32.totalorder %s19, 0
      %p154 = por %p152, %p153
      %p155 = scmp.le.s32.totalorder 1, %s13
      %p156 = scmp.lt.s32.totalorder %s13, 3
      %p157 = pnand %p155, %p156
      %p158 = pneg %p157
      // Predicated region
      $region9: #{tpu_custom_call.1} parent=5 // pred_check
        _
      $region10: #{tpu_custom_call.1} parent=5 // pred_check_branch
        %160 = sbr.rel (%p157) target = $region12
      $region11: #{tpu_custom_call.1} parent=5 // pred_region
        %s161 = ssub.s32 %s13, 1
        // Predicated region
        $region13: #{tpu_custom_call.1} parent=11 // pred_check
          %p162 = pneg %p72
        $region14: #{tpu_custom_call.1} parent=11 // pred_check_branch
          %164 = sbr.rel (%p162) target = $region16
        $region15: #{tpu_custom_call.1} parent=11 // pred_region
          _
        $region16: #{tpu_custom_call.1} parent=11 // pred_fallthru
          _
        // Predicated region
        $region17: #{tpu_custom_call.1} parent=11 // pred_check
          %p165 = pneg %p98
        $region18: #{tpu_custom_call.1} parent=11 // pred_check_branch
          %167 = sbr.rel (%p165) target = $region20
        $region19: #{tpu_custom_call.1} parent=11 // pred_region
          %p168 = scmp.lt.s32.totalorder %s23, 0
          %s169 = scalar_select %p168, %s23, 0
          %s170 = smul.addr %s169, 8
          %s171 = scalar_lea.vmem %s2, %s170
        $region20: #{tpu_custom_call.1} parent=11 // pred_fallthru
          _
        // Predicated region
        $region21: #{tpu_custom_call.1} parent=11 // pred_check
          %p172 = pneg %p119
        $region22: #{tpu_custom_call.1} parent=11 // pred_check_branch
          %174 = sbr.rel (%p172) target = $region24
        $region23: #{tpu_custom_call.1} parent=11 // pred_region
          _
        $region24: #{tpu_custom_call.1} parent=11 // pred_fallthru
          _
      $region12: #{tpu_custom_call.1} parent=5 // pred_fallthru
        _
      %p175 = scmp.lt.s32.totalorder %s13, 2
      // Predicated region
      $region25: #{tpu_custom_call.1} parent=5 // pred_check
        %p176 = pneg %p175
      $region26: #{tpu_custom_call.1} parent=5 // pred_check_branch
        %178 = sbr.rel (%p176) target = $region28
      $region27: #{tpu_custom_call.1} parent=5 // pred_region
        // Predicated region
        $region29: #{tpu_custom_call.1} parent=27 // pred_check
          %p179 = pneg %p45
        $region30: #{tpu_custom_call.1} parent=27 // pred_check_branch
          %181 = sbr.rel (%p179) target = $region32
        $region31: #{tpu_custom_call.1} parent=27 // pred_region
          %p182 = scmp.lt.s32.totalorder %s20, 1
          %s183 = scalar_select %p182, %s20, 1
          %s184 = smul.addr %s183, 8
          %s185 = scalar_lea.vmem %s0, %s184
        $region32: #{tpu_custom_call.1} parent=27 // pred_fallthru
          _
      $region28: #{tpu_custom_call.1} parent=5 // pred_fallthru
        _
      %p186 = scmp.le.s32.totalorder 1, %s13
      %p187 = scmp.lt.s32.totalorder %s13, 3
      %p188 = pnand %p186, %p187
      %p189 = pneg %p188
      // Predicated region
      $region33: #{tpu_custom_call.1} parent=5 // pred_check
        _
      $region34: #{tpu_custom_call.1} parent=5 // pred_check_branch
        %191 = sbr.rel (%p188) target = $region36
      $region35: #{tpu_custom_call.1} parent=5 // pred_region
        %s192 = ssub.s32 %s13, 1
        %p193 = scmp.lt.s32.totalorder %s22, 1
        %s194 = scalar_select %p193, %s22, 1
        %s195 = smul.addr %s194, 8
        %s196 = scalar_lea.vmem %s0, %s195
        %p197 = pneg %p51
        %p198 = pneg %p48
        %p199 = pneg %p72
        %p200 = pneg %p69
        %p201 = scmp.lt.s32.totalorder %s23, 0
        %s202 = scalar_select %p201, %s23, 0
        %s203 = smul.addr %s202, 8
        %s204 = scalar_lea.vmem %s2, %s203
        %p205 = pneg %p98
        %p206 = pneg %p95
        %p207 = pneg %p119
        %p208 = pneg %p116
        %p209 = pneg %p147
        %p210 = pneg %p144
        %s211 = sand.u32 %s134, 1
        %s212 = scalar_lea.sflag [#allocation4], %s211
        %s213 = sand.u32 %s134, 1
        %s214 = smul.addr %s213, 8
        %s215 = scalar_lea.vmem [#allocation3], %s214
        %p216 = scmp.lt.s32.totalorder %s22, 1
        %s217 = scalar_select %p216, %s22, 1
        %s218 = smul.addr %s217, 8
        %s219 = scalar_lea.vmem %s0, %s218
        %p220 = scmp.lt.s32.totalorder %s23, 0
        %s221 = scalar_select %p220, %s23, 0
        %s222 = smul.addr %s221, 8
        %s223 = scalar_lea.vmem %s2, %s222
        %p224 = scmp.eq.s32.totalorder %s23, 0
        // Predicated region
        $region37: #{tpu_custom_call.1} parent=35 // pred_check
          %p225 = pneg %p224
        $region38: #{tpu_custom_call.1} parent=35 // pred_check_branch
          %227 = sbr.rel (%p225) target = $region40
        $region39: #{tpu_custom_call.1} parent=35 // pred_region
          %v228 = vld [vmem:[%s219] sm:$0xff]
          %v229 = vld [vmem:[%s1] sm:$0xf]
          %vm230 = vcmask 31744
          %v232 = vsel %vm230, %v228, 0
          %vm234 = vcmask 1043456
          %v236 = vsel %vm234, %v229, 0
          %238 = vmatprep.subr.mxu0 0.0
          %239 = vmatpush1.msra.mxu0 %v236
          %240 = vmatprep.subr.mxu0 0.0
          %241 = vmatpush1.msra.mxu0 0.0
          %242 = vmatprep.subr.mxu0 0.0
          %243 = vmatpush1.msra.mxu0 0.0
          %244 = vmatprep.subr.mxu0 0.0
          %245 = vmatpush1.msra.mxu0 0.0
          %246 = vmatprep.subr.mxu0 0.0
          %247 = vmatpush1.msra.mxu0 0.0
          %248 = vmatprep.subr.mxu0 0.0
          %249 = vmatpush1.msra.mxu0 0.0
          %250 = vmatprep.subr.mxu0 0.0
          %251 = vmatpush1.msra.mxu0 0.0
          %252 = vmatprep.subr.mxu0 0.0
          %253 = vmatpush1.msra.mxu0 0.0
          %254 = vmatprep.subr.mxu0 0.0
          %255 = vmatpush1.msra.mxu0 0.0
          %256 = vmatprep.subr.mxu0 0.0
          %257 = vmatpush1.msra.mxu0 0.0
          %258 = vmatprep.subr.mxu0 0.0
          %259 = vmatpush1.msra.mxu0 0.0
          %260 = vmatprep.subr.mxu0 0.0
          %261 = vmatpush1.msra.mxu0 0.0
          %262 = vmatprep.subr.mxu0 0.0
          %263 = vmatpush1.msra.mxu0 0.0
          %264 = vmatprep.subr.mxu0 0.0
          %265 = vmatpush1.msra.mxu0 0.0
          %266 = vmatprep.subr.mxu0 0.0
          %267 = vmatpush1.msra.mxu0 0.0
          %268 = vmatprep.subr.mxu0 0.0
          %269 = vmatpush1.msra.mxu0 0.0
          %270 = vmatprep.subr.mxu0 0.0
          %271 = vmatpush1.msra.mxu0 0.0
          %272 = vmatprep.subr.mxu0 0.0
          %273 = vmatpush1.msra.mxu0 0.0
          %274 = vmatprep.subr.mxu0 0.0
          %275 = vmatpush1.msra.mxu0 0.0
          %276 = vmatprep.subr.mxu0 0.0
          %277 = vmatpush1.msra.mxu0 0.0
          %278 = vmatprep.subr.mxu0 0.0
          %279 = vmatpush1.msra.mxu0 0.0
          %280 = vmatprep.subr.mxu0 0.0
          %281 = vmatpush1.msra.mxu0 0.0
          %282 = vmatprep.subr.mxu0 0.0
          %283 = vmatpush1.msra.mxu0 0.0
          %284 = vmatprep.subr.mxu0 0.0
          %285 = vmatpush1.msra.mxu0 0.0
          %286 = vmatprep.subr.mxu0 0.0
          %287 = vmatpush1.msra.mxu0 0.0
          %288 = vmatprep.subr.mxu0 0.0
          %289 = vmatpush1.msra.mxu0 0.0
          %290 = vmatprep.subr.mxu0 0.0
          %291 = vmatpush1.msra.mxu0 0.0
          %292 = vmatprep.subr.mxu0 0.0
          %293 = vmatpush1.msra.mxu0 0.0
          %294 = vmatprep.subr.mxu0 0.0
          %295 = vmatpush1.msra.mxu0 0.0
          %296 = vmatprep.subr.mxu0 0.0
          %297 = vmatpush1.msra.mxu0 0.0
          %298 = vmatprep.subr.mxu0 0.0
          %299 = vmatpush1.msra.mxu0 0.0
          %300 = vmatprep.subr.mxu0 0.0
          %301 = vmatpush1.msra.mxu0 0.0
          %302 = vmatprep.mubr.f32.mxu0 0.0
          %303 = vmatmul.mubr.f32.gmra.mrb[0].mxu0 %v232
          %v304 = vpop.f32.mrb[0].mxu0
          %v305 = vadd.f32 0.0, %v304
          %v306 = vpop.f32.mrb[0].mxu0
          %307 = vdwg.mxu0
          %308 = vst [vmem:[#allocation2] sm:$0xff] %v305
        $region40: #{tpu_custom_call.1} parent=35 // pred_fallthru
          _
        %s309 = smul.u32 %s23, 8
        %v310 = vld [vmem:[%s3] sm:$0x1]
        %v311 = vld [vmem:[#allocation2] sm:$0xff]
        %s312 = scalar_lea.vmem [#allocation2], %s309
        %v313 = vld [vmem:[%s312] sm:$0xff]
        %314 = vmatprep.subr.mxu0 0.0
        %315 = vmatpush1.xpose.msra.mxu0 %v311
        %316 = vmatprep.subr.mxu0 0.0
        %317 = vmatpush1.xpose.msra.mxu0 0.0
        %318 = vmatprep.subr.mxu0 0.0
        %319 = vmatpush1.xpose.msra.mxu0 0.0
        %320 = vmatprep.subr.mxu0 0.0
        %321 = vmatpush1.xpose.msra.mxu0 0.0
        %322 = vmatprep.subr.mxu0 0.0
        %323 = vmatpush1.xpose.msra.mxu0 0.0
        %324 = vmatprep.subr.mxu0 0.0
        %325 = vmatpush1.xpose.msra.mxu0 0.0
        %326 = vmatprep.subr.mxu0 0.0
        %327 = vmatpush1.xpose.msra.mxu0 0.0
        %328 = vmatprep.subr.mxu0 0.0
        %329 = vmatpush1.xpose.msra.mxu0 0.0
        %330 = vmatprep.subr.mxu0 0.0
        %331 = vmatpush1.xpose.msra.mxu0 0.0
        %332 = vmatprep.subr.mxu0 0.0
        %333 = vmatpush1.xpose.msra.mxu0 0.0
        %334 = vmatprep.subr.mxu0 0.0
        %335 = vmatpush1.xpose.msra.mxu0 0.0
        %336 = vmatprep.subr.mxu0 0.0
        %337 = vmatpush1.xpose.msra.mxu0 0.0
        %338 = vmatprep.subr.mxu0 0.0
        %339 = vmatpush1.xpose.msra.mxu0 0.0
        %340 = vmatprep.subr.mxu0 0.0
        %341 = vmatpush1.xpose.msra.mxu0 0.0
        %342 = vmatprep.subr.mxu0 0.0
        %343 = vmatpush1.xpose.msra.mxu0 0.0
        %344 = vmatprep.subr.mxu0 0.0
        %345 = vmatpush1.xpose.msra.mxu0 0.0
        %346 = vmatprep.subr.mxu0 0.0
        %347 = vmatpush1.xpose.msra.mxu0 0.0
        %348 = vmatprep.subr.mxu0 0.0
        %349 = vmatpush1.xpose.msra.mxu0 0.0
        %350 = vmatprep.subr.mxu0 0.0
        %351 = vmatpush1.xpose.msra.mxu0 0.0
        %352 = vmatprep.subr.mxu0 0.0
        %353 = vmatpush1.xpose.msra.mxu0 0.0
        %354 = vmatprep.subr.mxu0 0.0
        %355 = vmatpush1.xpose.msra.mxu0 0.0
        %356 = vmatprep.subr.mxu0 0.0
        %357 = vmatpush1.xpose.msra.mxu0 0.0
        %358 = vmatprep.subr.mxu0 0.0
        %359 = vmatpush1.xpose.msra.mxu0 0.0
        %360 = vmatprep.subr.mxu0 0.0
        %361 = vmatpush1.xpose.msra.mxu0 0.0
        %362 = vmatprep.subr.mxu0 0.0
        %363 = vmatpush1.xpose.msra.mxu0 0.0
        %364 = vmatprep.subr.mxu0 0.0
        %365 = vmatpush1.xpose.msra.mxu0 0.0
        %366 = vmatprep.subr.mxu0 0.0
        %367 = vmatpush1.xpose.msra.mxu0 0.0
        %368 = vmatprep.subr.mxu0 0.0
        %369 = vmatpush1.xpose.msra.mxu0 0.0
        %370 = vmatprep.subr.mxu0 0.0
        %371 = vmatpush1.xpose.msra.mxu0 0.0
        %372 = vmatprep.subr.mxu0 0.0
        %373 = vmatpush1.xpose.msra.mxu0 0.0
        %374 = vmatprep.subr.mxu0 0.0
        %375 = vmatpush1.xpose.msra.mxu0 0.0
        %376 = vmatprep.subr.mxu0 0.0
        %377 = vmatpush1.xpose.msra.mxu0 0.0
        %378 = vmatprep.mubr.f32.mxu0 0.0
        %379 = vmatmul.mubr.f32.gmra.mrb[0].mxu0 %v313
        %v380 = vpop.f32.mrb[0].mxu0
        %v381 = vadd.f32 0.0, %v380
        %v382 = vpop.f32.mrb[0].mxu0
        %383 = vdwg.mxu0
        %v384 = vld [vmem:[%s223] sm:$0xff]
        %v385 = vmul.f32 %v381, %v384
        %vm386 = vcmp.eq.f32.partialorder %v385, 0.0
        %v387 = vsel %vm386, -1e+16, %v385
        %vm388 = vcmask 64512
        %v389 = vsel %vm388, %v387, -inf
        %390 = vmax.xlane.f32.xlu0 %v389
        %v391 = vpop.xlane.xlu0 %390
        %v392 = vsub.f32 %v387, %v391
        %v393 = vmul.f32 %v392, 1.442695
        %v394 = vpow.pop %v393
        %v395 = vsel %vm388, %v394, 0.0
        %396 = vadd.xlane.f32.xlu0 %v395
        %v397 = vpop.xlane.xlu0 %396
        %v398 = vrcp.pop %v397
        %v399 = vmul.f32 %v394, %v398
        %v401 = vlaneseq
        %v402 = vshrl.u32 %v401, 7
        %v403 = vsub.s32 0, %v402
        %v404 = vrot.slane %v310, %v403
        %v407 = vsel %vm388, %v399, 0
        %409 = vmatprep.subr.mxu0 0.0
        %410 = vmatpush1.msra.mxu0 %v311
        %411 = vmatprep.subr.mxu0 0.0
        %412 = vmatpush1.msra.mxu0 0.0
        %413 = vmatprep.subr.mxu0 0.0
        %414 = vmatpush1.msra.mxu0 0.0
        %415 = vmatprep.subr.mxu0 0.0
        %416 = vmatpush1.msra.mxu0 0.0
        %417 = vmatprep.subr.mxu0 0.0
        %418 = vmatpush1.msra.mxu0 0.0
        %419 = vmatprep.subr.mxu0 0.0
        %420 = vmatpush1.msra.mxu0 0.0
        %421 = vmatprep.subr.mxu0 0.0
        %422 = vmatpush1.msra.mxu0 0.0
        %423 = vmatprep.subr.mxu0 0.0
        %424 = vmatpush1.msra.mxu0 0.0
        %425 = vmatprep.subr.mxu0 0.0
        %426 = vmatpush1.msra.mxu0 0.0
        %427 = vmatprep.subr.mxu0 0.0
        %428 = vmatpush1.msra.mxu0 0.0
        %429 = vmatprep.subr.mxu0 0.0
        %430 = vmatpush1.msra.mxu0 0.0
        %431 = vmatprep.subr.mxu0 0.0
        %432 = vmatpush1.msra.mxu0 0.0
        %433 = vmatprep.subr.mxu0 0.0
        %434 = vmatpush1.msra.mxu0 0.0
        %435 = vmatprep.subr.mxu0 0.0
        %436 = vmatpush1.msra.mxu0 0.0
        %437 = vmatprep.subr.mxu0 0.0
        %438 = vmatpush1.msra.mxu0 0.0
        %439 = vmatprep.subr.mxu0 0.0
        %440 = vmatpush1.msra.mxu0 0.0
        %441 = vmatprep.subr.mxu0 0.0
        %442 = vmatpush1.msra.mxu0 0.0
        %443 = vmatprep.subr.mxu0 0.0
        %444 = vmatpush1.msra.mxu0 0.0
        %445 = vmatprep.subr.mxu0 0.0
        %446 = vmatpush1.msra.mxu0 0.0
        %447 = vmatprep.subr.mxu0 0.0
        %448 = vmatpush1.msra.mxu0 0.0
        %449 = vmatprep.subr.mxu0 0.0
        %450 = vmatpush1.msra.mxu0 0.0
        %451 = vmatprep.subr.mxu0 0.0
        %452 = vmatpush1.msra.mxu0 0.0
        %453 = vmatprep.subr.mxu0 0.0
        %454 = vmatpush1.msra.mxu0 0.0
        %455 = vmatprep.subr.mxu0 0.0
        %456 = vmatpush1.msra.mxu0 0.0
        %457 = vmatprep.subr.mxu0 0.0
        %458 = vmatpush1.msra.mxu0 0.0
        %459 = vmatprep.subr.mxu0 0.0
        %460 = vmatpush1.msra.mxu0 0.0
        %461 = vmatprep.subr.mxu0 0.0
        %462 = vmatpush1.msra.mxu0 0.0
        %463 = vmatprep.subr.mxu0 0.0
        %464 = vmatpush1.msra.mxu0 0.0
        %465 = vmatprep.subr.mxu0 0.0
        %466 = vmatpush1.msra.mxu0 0.0
        %467 = vmatprep.subr.mxu0 0.0
        %468 = vmatpush1.msra.mxu0 0.0
        %469 = vmatprep.subr.mxu0 0.0
        %470 = vmatpush1.msra.mxu0 0.0
        %471 = vmatprep.subr.mxu0 0.0
        %472 = vmatpush1.msra.mxu0 0.0
        %473 = vmatprep.mubr.f32.mxu0 0.0
        %474 = vmatmul.mubr.f32.gmra.mrb[0].mxu0 %v407
        %v475 = vpop.f32.mrb[0].mxu0
        %v476 = vadd.f32 %v404, %v475
        %v477 = vpop.f32.mrb[0].mxu0
        %478 = vdwg.mxu0
        %479 = vst [vmem:[%s215] sm:$0xff] %v476
        %s480 = sand.u32 %s134, 1
        %s481 = scalar_lea.sflag [#allocation4], %s480
        %s482 = sand.u32 %s134, 1
        %s483 = smul.addr %s482, 8
        %s484 = scalar_lea.vmem [#allocation3], %s483
        // Predicated region
        $region41: #{tpu_custom_call.1} parent=35 // pred_check
          %p485 = pneg %p144
        $region42: #{tpu_custom_call.1} parent=35 // pred_check_branch
          %487 = sbr.rel (%p485) target = $region44
        $region43: #{tpu_custom_call.1} parent=35 // pred_region
          %s489 = ssub.s32 128, 128
          %490 = vsyncadd %s481, %s489
          %s491 = sadd.s32 %s23, %s22
          %s492 = smul.addr %s491, 128
          %s493 = scalar_lea.hbm %s4, %s492
          %s495 = sshll.u32 %s484, 4
          %s496 = int_to_ptr.vmem [resolvable:$true] %s495
          %498 = dma.vmem_to_hbm [thread:$0]  %s496, 128, %s493, %s481
        $region44: #{tpu_custom_call.1} parent=35 // pred_fallthru
          _
      $region36: #{tpu_custom_call.1} parent=5 // pred_fallthru
        _
      %p499 = scmp.le.s32.totalorder 2, %s13
      // Predicated region
      $region45: #{tpu_custom_call.1} parent=5 // pred_check
        %p500 = pneg %p499
      $region46: #{tpu_custom_call.1} parent=5 // pred_check_branch
        %502 = sbr.rel (%p500) target = $region48
      $region47: #{tpu_custom_call.1} parent=5 // pred_region
        %s503 = ssub.s32 %s13, 2
        // Predicated region
        $region49: #{tpu_custom_call.1} parent=47 // pred_check
          %p504 = pneg %p150
        $region50: #{tpu_custom_call.1} parent=47 // pred_check_branch
          %506 = sbr.rel (%p504) target = $region52
        $region51: #{tpu_custom_call.1} parent=47 // pred_region
          %s507 = sand.u32 %s135, 1
          %s508 = scalar_lea.sflag [#allocation4], %s507
          %s509 = sand.u32 %s135, 1
          %s510 = smul.addr %s509, 8
          %s511 = scalar_lea.vmem [#allocation3], %s510
          %512 = dma.done %s508, 128
        $region52: #{tpu_custom_call.1} parent=47 // pred_fallthru
          _
      $region48: #{tpu_custom_call.1} parent=5 // pred_fallthru
        _
    $region6: #{tpu_custom_call.1} parent=1 // loop_footer
      %s17 = sadd.s32 1, %s13
    $region7: #{tpu_custom_call.1} parent=1 // loop_footer_branch
      %12 = sbr.rel target = $region3
    $region8: #{tpu_custom_call.1} parent=1 // loop_exit
      _
    %513 = vsyncpa [#allocation4], 1
    %s514 = scalar_lea.sflag [#allocation4], 1
    %515 = vsyncpa %s514, 1

</llo_original>
